<compile_context>
chip_gen: v5e
topology: v5e:2x2
jax: 0.10.0
libtpu: 0.0.40
codegen_flags: <defaults>
</compile_context>

<pallas_src>
import math
from functools import partial

import jax
import jax.numpy as jnp
from jax.experimental import pallas as pl
from jax.experimental.pallas import tpu as pltpu


# ----------------------------------------------------------------------------- kernel

def dqn_forward_kernel(x_ref, w1_ref, b1_ref, w2_ref, b2_ref, w3_ref, b3_ref, out_ref):
    # One batch tile per grid step; weights/biases are whole-array blocks (constant
    # index_map) and therefore VMEM-resident across all grid steps.  Pure f32 path.
    x = x_ref[...]
    h1 = jnp.dot(x, w1_ref[...], preferred_element_type=jnp.float32) + b1_ref[...]
    h1 = jnp.maximum(h1, 0.0)                                              # ReLU (VPU)
    h2 = jnp.dot(h1, w2_ref[...], preferred_element_type=jnp.float32) + b2_ref[...]
    h2 = jnp.maximum(h2, 0.0)                                              # ReLU (VPU)
    out = jnp.dot(h2, w3_ref[...], preferred_element_type=jnp.float32) + b3_ref[...]
    out_ref[...] = out.astype(out_ref.dtype)


# ----------------------------------------------------------------------------- helpers

def _round_up(n, m):
    return ((n + m - 1) // m) * m


_SINGLE_TILE_MAX_ROWS = 2048     # below this, run the whole batch as one grid step
_LARGE_BATCH_BLOCK = 1024        # tile size for the multi-step (large batch) path
_OUT_LANE_PAD = 8                # pad n_actions only to 8 lanes (16x less writeback vs 128)


def prepare_params(params, dtype=jnp.float32):
    """One-time param prep: cast to f32 and zero-pad the last layer to _OUT_LANE_PAD lanes.

    Called once at init/param-load time so dqn_forward does no per-call padding/casting.
    """
    n_actions = params["w3"].shape[1]
    n_pad = _round_up(max(n_actions, _OUT_LANE_PAD), _OUT_LANE_PAD)
    p = {k: jnp.asarray(v, dtype) for k, v in params.items()}
    p["w3"] = jnp.pad(p["w3"], ((0, 0), (0, n_pad - n_actions)))
    p["b3"] = jnp.pad(p["b3"], ((0, 0), (0, n_pad - n_actions)))
    return p


def _choose_tiling(B, block_b):
    if block_b is None:
        if B <= _SINGLE_TILE_MAX_ROWS:
            block_b = _round_up(max(B, 8), 8)          # single grid step
        else:
            block_b = _LARGE_BATCH_BLOCK
    B_pad = _round_up(B, block_b)
    steps = B_pad // block_b
    # v7x megacore: with a multi-step grid, make the step count even so both TCs get
    # equal work under dimension_semantics=("parallel",).
    if steps > 1 and steps % 2 == 1:
        B_pad = _round_up(B, 2 * block_b)
        steps = B_pad // block_b
    return block_b, B_pad, steps


@partial(jax.jit, static_argnames=("n_actions", "block_b"))
def dqn_forward(x, prepped, *, n_actions, block_b=None):
    """DQN forward pass with a Pallas kernel gridded over the batch.

    x:        (B, input_dim) float32 observations
    prepped:  output of prepare_params() (w3/b3 already lane-padded, all f32)
    returns:  (B, n_actions) float32 action values
    """
    B, input_dim = x.shape
    fc1_dims = prepped["w1"].shape[1]
    fc2_dims = prepped["w2"].shape[1]
    n_pad = prepped["w3"].shape[1]

    block_b, B_pad, steps = _choose_tiling(B, block_b)
    if B_pad != B:
        x = jnp.pad(x, ((0, B_pad - B), (0, 0)))

    weight_spec = lambda shape: pl.BlockSpec(shape, lambda i: (0, 0))      # VMEM-resident

    cost = pl.CostEstimate(
        flops=2 * B_pad * (input_dim * fc1_dims + fc1_dims * fc2_dims + fc2_dims * n_pad),
        transcendentals=0,
        bytes_accessed=4 * (B_pad * (input_dim + n_pad)
                            + input_dim * fc1_dims + fc1_dims
                            + fc1_dims * fc2_dims + fc2_dims
                            + fc2_dims * n_pad + n_pad),
    )

    out = pl.pallas_call(
        dqn_forward_kernel,
        out_shape=jax.ShapeDtypeStruct((B_pad, n_pad), jnp.float32),
        grid=(steps,),
        in_specs=[
            pl.BlockSpec((block_b, input_dim), lambda i: (i, 0)),          # x: streamed by batch tile
            weight_spec(prepped["w1"].shape),
            weight_spec(prepped["b1"].shape),
            weight_spec(prepped["w2"].shape),
            weight_spec(prepped["b2"].shape),
            weight_spec(prepped["w3"].shape),
            weight_spec(prepped["b3"].shape),
        ],
        out_specs=pl.BlockSpec((block_b, n_pad), lambda i: (i, 0)),
        compiler_params=pltpu.CompilerParams(
            dimension_semantics=("parallel",),                             # megacore batch sharding
        ),
        cost_estimate=cost,
    )(x, prepped["w1"], prepped["b1"], prepped["w2"], prepped["b2"],
      prepped["w3"], prepped["b3"])

    return out[:B, :n_actions]


# Plain-XLA fallback for the tiny-B action-selection path (B ~ 1..64), where a fused
# matmul chain is launch-latency competitive and needs no padding/slicing traffic.
@jax.jit
def dqn_forward_xla(x, params):
    h1 = jnp.maximum(x @ params["w1"] + params["b1"], 0.0)
    h2 = jnp.maximum(h1 @ params["w2"] + params["b2"], 0.0)
    return h2 @ params["w3"] + params["b3"]


# ----------------------------------------------------------------------------- init / reference

def init_params(key, input_dim, fc1_dims, fc2_dims, n_actions):
    """Deterministic init mimicking PyTorch nn.Linear default (U[-1/sqrt(fan_in), +1/sqrt(fan_in)])."""
    keys = jax.random.split(key, 6)

    def linear(kw, kb, fan_in, fan_out):
        bound = 1.0 / math.sqrt(fan_in)
        w = jax.random.uniform(kw, (fan_in, fan_out), jnp.float32, -bound, bound)
        b = jax.random.uniform(kb, (1, fan_out), jnp.float32, -bound, bound)
        return w, b

    w1, b1 = linear(keys[0], keys[1], input_dim, fc1_dims)
    w2, b2 = linear(keys[2], keys[3], fc1_dims, fc2_dims)
    w3, b3 = linear(keys[4], keys[5], fc2_dims, n_actions)
    return {"w1": w1, "b1": b1, "w2": w2, "b2": b2, "w3": w3, "b3": b3}


def _reference(x, params):
    h1 = jnp.maximum(x @ params["w1"] + params["b1"], 0.0)
    h2 = jnp.maximum(h1 @ params["w2"] + params["b2"], 0.0)
    return h2 @ params["w3"] + params["b3"]


# ----------------------------------------------------------------------------- main

if __name__ == "__main__":
    # Module hyperparameters consistent with DeepQNetwork(ALPHA, input_dims=[8], 32, 32, 4).
    input_dim, fc1_dims, fc2_dims, n_actions = 8, 32, 32, 4

    key = jax.random.PRNGKey(0)
    k_obs, k_params = jax.random.split(key)
    params = init_params(k_params, input_dim, fc1_dims, fc2_dims, n_actions)
    prepped = prepare_params(params)   # one-time: pad w3/b3 to 8 lanes, all f32

    # Small batch (action selection): single-step grid, no pipelining overhead.
    observation = jax.random.normal(k_obs, (2, input_dim), jnp.float32)
    actions = jax.block_until_ready(dqn_forward(observation, prepped, n_actions=n_actions))
    ref = _reference(observation, params)
    assert actions.shape == (2, n_actions)
    assert jnp.allclose(actions, ref, atol=1e-5, rtol=1e-5)

    # XLA fallback path for tiny batches matches too.
    actions_xla = jax.block_until_ready(dqn_forward_xla(observation, params))
    assert jnp.allclose(actions_xla, ref, atol=1e-5, rtol=1e-5)

    # Medium, non-multiple-of-8 batch: still a single grid step (B_pad <= 2048).
    mid_obs = jax.random.normal(jax.random.PRNGKey(1), (1000, input_dim), jnp.float32)
    mid_actions = jax.block_until_ready(dqn_forward(mid_obs, prepped, n_actions=n_actions))
    mid_ref = _reference(mid_obs, params)
    assert mid_actions.shape == (1000, n_actions)
    assert jnp.allclose(mid_actions, mid_ref, atol=1e-4, rtol=1e-4)

    # Large batch: multi-step grid with block_b=1024 and an EVEN step count (v7x megacore).
    big_obs = jax.random.normal(jax.random.PRNGKey(2), (5000, input_dim), jnp.float32)
    big_actions = jax.block_until_ready(dqn_forward(big_obs, prepped, n_actions=n_actions))
    big_ref = _reference(big_obs, params)
    assert big_actions.shape == (5000, n_actions)
    assert jnp.allclose(big_actions, big_ref, atol=1e-4, rtol=1e-4)

    print("KERNEL_OK")
</pallas_src>

<mosaic_0001>
module attributes {stable_mosaic.version = 11 : i64} {
  func.func @dqn_forward_kernel(%arg0: i32, %arg1: memref<8x8xf32, #tpu.memory_space<vmem>>, %arg2: memref<8x32xf32, #tpu.memory_space<vmem>>, %arg3: memref<1x32xf32, #tpu.memory_space<vmem>>, %arg4: memref<32x32xf32, #tpu.memory_space<vmem>>, %arg5: memref<1x32xf32, #tpu.memory_space<vmem>>, %arg6: memref<32x8xf32, #tpu.memory_space<vmem>>, %arg7: memref<1x8xf32, #tpu.memory_space<vmem>>, %arg8: memref<8x8xf32, #tpu.memory_space<vmem>>) attributes {dimension_semantics = [#tpu.dimension_semantics<parallel>], iteration_bounds = array<i64: 1>, scalar_prefetch = 0 : i64, scratch_operands = 0 : i64, tpu.core_type = #tpu.core_type<tc>, window_params = [{transform_indices = @transform_0, window_bounds = array<i64: 8, 8>}, {pipeline_mode = #tpu.pipeline_mode<synchronous>, transform_indices = @transform_1, window_bounds = array<i64: 8, 32>}, {pipeline_mode = #tpu.pipeline_mode<synchronous>, transform_indices = @transform_2, window_bounds = array<i64: 1, 32>}, {pipeline_mode = #tpu.pipeline_mode<synchronous>, transform_indices = @transform_3, window_bounds = array<i64: 32, 32>}, {pipeline_mode = #tpu.pipeline_mode<synchronous>, transform_indices = @transform_4, window_bounds = array<i64: 1, 32>}, {pipeline_mode = #tpu.pipeline_mode<synchronous>, transform_indices = @transform_5, window_bounds = array<i64: 32, 8>}, {pipeline_mode = #tpu.pipeline_mode<synchronous>, transform_indices = @transform_6, window_bounds = array<i64: 1, 8>}, {transform_indices = @transform_7, window_bounds = array<i64: 8, 8>}]} {
    %c0 = arith.constant 0 : index
    %c0_0 = arith.constant 0 : index
    %0 = vector.load %arg1[%c0, %c0_0] : memref<8x8xf32, #tpu.memory_space<vmem>>, vector<8x8xf32>
    %c0_1 = arith.constant 0 : index
    %c0_2 = arith.constant 0 : index
    %1 = vector.load %arg2[%c0_1, %c0_2] : memref<8x32xf32, #tpu.memory_space<vmem>>, vector<8x32xf32>
    %cst = arith.constant dense<0.000000e+00> : vector<8x32xf32>
    %2 = tpu.matmul %0, %1, %cst {dimension_numbers = #tpu.dot_dimension_numbers<[1], [0], [0], [1], [0, 0, 1, 1], [], []>} : vector<8x8xf32>, vector<8x32xf32>, vector<8x32xf32> -> vector<8x32xf32>
    %c0_3 = arith.constant 0 : index
    %c0_4 = arith.constant 0 : index
    %3 = vector.load %arg3[%c0_3, %c0_4] : memref<1x32xf32, #tpu.memory_space<vmem>>, vector<1x32xf32>
    %4 = vector.broadcast %3 : vector<1x32xf32> to vector<8x32xf32>
    %5 = arith.addf %2, %4 : vector<8x32xf32>
    %cst_5 = arith.constant 0.000000e+00 : f32
    %6 = vector.broadcast %cst_5 : f32 to vector<8x32xf32>
    %7 = arith.maximumf %5, %6 : vector<8x32xf32>
    %c0_6 = arith.constant 0 : index
    %c0_7 = arith.constant 0 : index
    %8 = vector.load %arg4[%c0_6, %c0_7] : memref<32x32xf32, #tpu.memory_space<vmem>>, vector<32x32xf32>
    %cst_8 = arith.constant dense<0.000000e+00> : vector<8x32xf32>
    %9 = tpu.matmul %7, %8, %cst_8 {dimension_numbers = #tpu.dot_dimension_numbers<[1], [0], [0], [1], [0, 0, 1, 1], [], []>} : vector<8x32xf32>, vector<32x32xf32>, vector<8x32xf32> -> vector<8x32xf32>
    %c0_9 = arith.constant 0 : index
    %c0_10 = arith.constant 0 : index
    %10 = vector.load %arg5[%c0_9, %c0_10] : memref<1x32xf32, #tpu.memory_space<vmem>>, vector<1x32xf32>
    %11 = vector.broadcast %10 : vector<1x32xf32> to vector<8x32xf32>
    %12 = arith.addf %9, %11 : vector<8x32xf32>
    %cst_11 = arith.constant 0.000000e+00 : f32
    %13 = vector.broadcast %cst_11 : f32 to vector<8x32xf32>
    %14 = arith.maximumf %12, %13 : vector<8x32xf32>
    %c0_12 = arith.constant 0 : index
    %c0_13 = arith.constant 0 : index
    %15 = vector.load %arg6[%c0_12, %c0_13] : memref<32x8xf32, #tpu.memory_space<vmem>>, vector<32x8xf32>
    %cst_14 = arith.constant dense<0.000000e+00> : vector<8x8xf32>
    %16 = tpu.matmul %14, %15, %cst_14 {dimension_numbers = #tpu.dot_dimension_numbers<[1], [0], [0], [1], [0, 0, 1, 1], [], []>} : vector<8x32xf32>, vector<32x8xf32>, vector<8x8xf32> -> vector<8x8xf32>
    %c0_15 = arith.constant 0 : index
    %c0_16 = arith.constant 0 : index
    %17 = vector.load %arg7[%c0_15, %c0_16] : memref<1x8xf32, #tpu.memory_space<vmem>>, vector<1x8xf32>
    %18 = vector.broadcast %17 : vector<1x8xf32> to vector<8x8xf32>
    %19 = arith.addf %16, %18 : vector<8x8xf32>
    %c0_17 = arith.constant 0 : index
    %c0_18 = arith.constant 0 : index
    %20 = vector.load %arg8[%c0_17, %c0_18] : memref<8x8xf32, #tpu.memory_space<vmem>>, vector<8x8xf32>
    tpu.vector_store %arg8[%c0_17, %c0_18], %19 {strides = array<i32>} : memref<8x8xf32, #tpu.memory_space<vmem>>, vector<8x8xf32>,
    return
  }
  func.func @transform_0(%arg0: i32) -> (i32, i32) {
    %c0_i32 = arith.constant 0 : i32
    %c0_i32_0 = arith.constant 0 : i32
    return %arg0, %c0_i32 : i32, i32
  }
  func.func @transform_1(%arg0: i32) -> (i32, i32) {
    %c0_i32 = arith.constant 0 : i32
    %c0_i32_0 = arith.constant 0 : i32
    %c0_i32_1 = arith.constant 0 : i32
    return %c0_i32, %c0_i32_0 : i32, i32
  }
  func.func @transform_2(%arg0: i32) -> (i32, i32) {
    %c0_i32 = arith.constant 0 : i32
    %c0_i32_0 = arith.constant 0 : i32
    %c0_i32_1 = arith.constant 0 : i32
    return %c0_i32, %c0_i32_0 : i32, i32
  }
  func.func @transform_3(%arg0: i32) -> (i32, i32) {
    %c0_i32 = arith.constant 0 : i32
    %c0_i32_0 = arith.constant 0 : i32
    %c0_i32_1 = arith.constant 0 : i32
    return %c0_i32, %c0_i32_0 : i32, i32
  }
  func.func @transform_4(%arg0: i32) -> (i32, i32) {
    %c0_i32 = arith.constant 0 : i32
    %c0_i32_0 = arith.constant 0 : i32
    %c0_i32_1 = arith.constant 0 : i32
    return %c0_i32, %c0_i32_0 : i32, i32
  }
  func.func @transform_5(%arg0: i32) -> (i32, i32) {
    %c0_i32 = arith.constant 0 : i32
    %c0_i32_0 = arith.constant 0 : i32
    %c0_i32_1 = arith.constant 0 : i32
    return %c0_i32, %c0_i32_0 : i32, i32
  }
  func.func @transform_6(%arg0: i32) -> (i32, i32) {
    %c0_i32 = arith.constant 0 : i32
    %c0_i32_0 = arith.constant 0 : i32
    %c0_i32_1 = arith.constant 0 : i32
    return %c0_i32, %c0_i32_0 : i32, i32
  }
  func.func @transform_7(%arg0: i32) -> (i32, i32) {
    %c0_i32 = arith.constant 0 : i32
    %c0_i32_0 = arith.constant 0 : i32
    return %arg0, %c0_i32 : i32, i32
  }
}

</mosaic_0001>

<llo_original>
// kernel: dqn_forward.1
$region0: #{dqn_forward.1}
  #allocation0 [shape = 'u32[]', space=smem, size = 0x4, offset = 0x4, fixed_abs, tag = 'smem constant byte address 0x4 - core index']
  #allocation1 [shape = 'u32[72,128]{1,0:T(1,128)}', space=vmem, size = 0x9000, scoped, tag = 'internal scratch']
  %s0 = inlined_call_operand.vmem [shape: f32[8,8], index: 0, kind: input, shape index: {}]
  %s1 = inlined_call_operand.vmem [shape: f32[8,32], index: 1, kind: input, shape index: {}]
  %s2 = inlined_call_operand.vmem [shape: f32[1,32], index: 2, kind: input, shape index: {}]
  %s3 = inlined_call_operand.vmem [shape: f32[32,32], index: 3, kind: input, shape index: {}]
  %s4 = inlined_call_operand.vmem [shape: f32[1,32], index: 4, kind: input, shape index: {}]
  %s5 = inlined_call_operand.vmem [shape: f32[32,8], index: 5, kind: input, shape index: {}]
  %s6 = inlined_call_operand.vmem [shape: f32[1,8], index: 6, kind: input, shape index: {}]
  %s7 = inlined_call_operand.vmem [shape: f32[8,8], index: 7, kind: output, shape index: {}]
  %s8 = sld [smem:[#allocation0]]
  $region38: #{dqn_forward.1} parent=0
    _
  %s10 = ssub.s32 1, %s8
  %s11 = scalar_select 0, %s10, %s8
  // Predicated region
  $region2: #{dqn_forward.1} parent=0 // pred_check
    _
  $region3: #{dqn_forward.1} parent=0 // pred_check_branch
    %13 = sbr.rel (0) target = $region5
  $region4: #{dqn_forward.1} parent=0 // pred_region
    _
  $region5: #{dqn_forward.1} parent=0 // pred_fallthru
    _
  // Predicated region
  $region6: #{dqn_forward.1} parent=0 // pred_check
    _
  $region7: #{dqn_forward.1} parent=0 // pred_check_branch
    %15 = sbr.rel (0) target = $region9
  $region8: #{dqn_forward.1} parent=0 // pred_region
    _
  $region9: #{dqn_forward.1} parent=0 // pred_fallthru
    _
  // Predicated region
  $region10: #{dqn_forward.1} parent=0 // pred_check
    _
  $region11: #{dqn_forward.1} parent=0 // pred_check_branch
    %17 = sbr.rel (0) target = $region13
  $region12: #{dqn_forward.1} parent=0 // pred_region
    _
  $region13: #{dqn_forward.1} parent=0 // pred_fallthru
    _
  // Predicated region
  $region14: #{dqn_forward.1} parent=0 // pred_check
    _
  $region15: #{dqn_forward.1} parent=0 // pred_check_branch
    %19 = sbr.rel (0) target = $region17
  $region16: #{dqn_forward.1} parent=0 // pred_region
    _
  $region17: #{dqn_forward.1} parent=0 // pred_fallthru
    _
  // Predicated region
  $region18: #{dqn_forward.1} parent=0 // pred_check
    _
  $region19: #{dqn_forward.1} parent=0 // pred_check_branch
    %21 = sbr.rel (0) target = $region21
  $region20: #{dqn_forward.1} parent=0 // pred_region
    _
  $region21: #{dqn_forward.1} parent=0 // pred_fallthru
    _
  // Predicated region
  $region22: #{dqn_forward.1} parent=0 // pred_check
    _
  $region23: #{dqn_forward.1} parent=0 // pred_check_branch
    %23 = sbr.rel (0) target = $region25
  $region24: #{dqn_forward.1} parent=0 // pred_region
    _
  $region25: #{dqn_forward.1} parent=0 // pred_fallthru
    _
  // Predicated region
  $region26: #{dqn_forward.1} parent=0 // pred_check
    _
  $region27: #{dqn_forward.1} parent=0 // pred_check_branch
    %25 = sbr.rel (0) target = $region29
  $region28: #{dqn_forward.1} parent=0 // pred_region
    _
  $region29: #{dqn_forward.1} parent=0 // pred_fallthru
    _
  %v26 = vld [vmem:[%s0] sm:$0xff]
  %v27 = vld [vmem:[%s1] sm:$0xff]
  %v28 = vld [vmem:[%s2] sm:$0x1]
  %v30 = vperm.slane %v28, 0
  %vm32 = vcmask 64512
  %v34 = vsel %vm32, %v26, 0
  %36 = vmatpush.msra.mxu0 0.0
  %37 = vmatpush.msra.mxu0 0.0
  %38 = vmatpush.msra.mxu0 0.0
  %39 = vmatpush.msra.mxu0 0.0
  %40 = vmatpush.msra.mxu0 0.0
  %41 = vmatpush.msra.mxu0 0.0
  %42 = vmatpush.msra.mxu0 0.0
  %43 = vmatpush.msra.mxu0 0.0
  %44 = vmatpush.msra.mxu0 0.0
  %45 = vmatpush.msra.mxu0 0.0
  %46 = vmatpush.msra.mxu0 0.0
  %47 = vmatpush.msra.mxu0 0.0
  %48 = vmatpush.msra.mxu0 0.0
  %49 = vmatpush.msra.mxu0 0.0
  %50 = vmatpush.msra.mxu0 0.0
  %51 = vmatpush.msra.mxu0 %v27
  %52 = vmatmul.f32.gmra.mxu0 %v34
  %v53 = vpop.f32.mrf.mxu0
  %v54 = vadd.f32 %v30, %v53
  %55 = vdwg.mxu0
  %v56 = vmax.f32 %v54, 0.0
  %v57 = vld [vmem:[%s3] sm:$0xff]
  %v58 = vld [vmem:[%s3 + $0x8] sm:$0xff]
  %v59 = vld [vmem:[%s3 + $0x10] sm:$0xff]
  %v60 = vld [vmem:[%s3 + $0x18] sm:$0xff]
  %v61 = vld [vmem:[%s4] sm:$0x1]
  %v63 = vperm.slane %v61, 0
  %vm65 = vcmask 261120
  %v67 = vsel %vm65, %v56, 0
  %69 = vmatpush.msra.mxu0 0.0
  %70 = vmatpush.msra.mxu0 0.0
  %71 = vmatpush.msra.mxu0 0.0
  %72 = vmatpush.msra.mxu0 0.0
  %73 = vmatpush.msra.mxu0 0.0
  %74 = vmatpush.msra.mxu0 0.0
  %75 = vmatpush.msra.mxu0 0.0
  %76 = vmatpush.msra.mxu0 0.0
  %77 = vmatpush.msra.mxu0 0.0
  %78 = vmatpush.msra.mxu0 0.0
  %79 = vmatpush.msra.mxu0 0.0
  %80 = vmatpush.msra.mxu0 0.0
  %81 = vmatpush.msra.mxu0 %v60
  %82 = vmatpush.msra.mxu0 %v59
  %83 = vmatpush.msra.mxu0 %v58
  %84 = vmatpush.msra.mxu0 %v57
  %85 = vmatmul.f32.gmra.mxu0 %v67
  %v86 = vpop.f32.mrf.mxu0
  %v87 = vadd.f32 %v63, %v86
  %88 = vdwg.mxu0
  %v89 = vmax.f32 %v87, 0.0
  %v90 = vld [vmem:[%s5] sm:$0xff]
  %v91 = vld [vmem:[%s5 + $0x8] sm:$0xff]
  %v92 = vld [vmem:[%s5 + $0x10] sm:$0xff]
  %v93 = vld [vmem:[%s5 + $0x18] sm:$0xff]
  %v94 = vld [vmem:[%s6] sm:$0x1]
  %v96 = vperm.slane %v94, 0
  %v99 = vsel %vm65, %v89, 0
  %101 = vmatpush.msra.mxu0 0.0
  %102 = vmatpush.msra.mxu0 0.0
  %103 = vmatpush.msra.mxu0 0.0
  %104 = vmatpush.msra.mxu0 0.0
  %105 = vmatpush.msra.mxu0 0.0
  %106 = vmatpush.msra.mxu0 0.0
  %107 = vmatpush.msra.mxu0 0.0
  %108 = vmatpush.msra.mxu0 0.0
  %109 = vmatpush.msra.mxu0 0.0
  %110 = vmatpush.msra.mxu0 0.0
  %111 = vmatpush.msra.mxu0 0.0
  %112 = vmatpush.msra.mxu0 0.0
  %113 = vmatpush.msra.mxu0 %v93
  %114 = vmatpush.msra.mxu0 %v92
  %115 = vmatpush.msra.mxu0 %v91
  %116 = vmatpush.msra.mxu0 %v90
  %117 = vmatmul.f32.gmra.mxu0 %v99
  %v118 = vpop.f32.mrf.mxu0
  %v119 = vadd.f32 %v96, %v118
  %120 = vdwg.mxu0
  %121 = vst.msk [vmem:[%s7] sm:$0xff] %vm32, %v119
  // Predicated region
  $region30: #{dqn_forward.1} parent=0 // pred_check
    _
  $region31: #{dqn_forward.1} parent=0 // pred_check_branch
    %123 = sbr.rel (0) target = $region33
  $region32: #{dqn_forward.1} parent=0 // pred_region
    _
  $region33: #{dqn_forward.1} parent=0 // pred_fallthru
    _
  // Predicated region
  $region34: #{dqn_forward.1} parent=0 // pred_check
    _
  $region35: #{dqn_forward.1} parent=0 // pred_check_branch
    %125 = sbr.rel (0) target = $region37
  $region36: #{dqn_forward.1} parent=0 // pred_region
    _
  $region37: #{dqn_forward.1} parent=0 // pred_fallthru
    _

</llo_original>
